<compile_context>
chip_gen: v7x
topology: tpu7x:2x2x1
jax: 0.10.0
libtpu: 0.0.40
codegen_flags: <defaults>
</compile_context>

<pallas_src>
import math

import jax
import jax.numpy as jnp
from jax.experimental import pallas as pl
from jax.experimental.pallas import tpu as pltpu

_DEFAULT_ALPHA = 1e-06


def _round_up(n, m):
    return ((n + m - 1) // m) * m


def _make_kernel(alpha: float):
    scale = 1.0 - 2.0 * alpha
    log_scale = math.log(scale)

    def kernel(x_ref, y_ref, ldsum_ref):
        k = pl.program_id(1)

        # ldsum block index is constant along k -> block stays resident in
        # VMEM across the reduction axis; zero it on the first k step.
        @pl.when(k == 0)
        def _():
            ldsum_ref[...] = jnp.zeros_like(ldsum_ref)

        x = x_ref[...]                            # (rt, ct) f32
        s = alpha + scale * x
        ls = jnp.log(s)                           # EUP
        l1s = jnp.log(1.0 - s)                    # EUP
        y_ref[...] = ls - l1s                     # logit(s), full lane-dense store
        # log|dy/dx| = -log(s*(1-s)) + log(1-2a) = log_scale - (ls + l1s)
        ld = log_scale - (ls + l1s)
        ldsum_ref[...] += jnp.sum(ld, axis=-1, keepdims=True)

    return kernel


def logit_transform_forward(x, logpx, alpha=_DEFAULT_ALPHA,
                            row_tile=256, col_tile=2048):
    """x: (B, C, H, W) float, logpx: (B, 1) float -> (y, logpx - sum(logdet))."""
    orig_shape = x.shape
    B = orig_shape[0]
    x2d = jnp.asarray(x, jnp.float32).reshape(B, -1)          # (B, D)
    D = x2d.shape[1]
    logpx = jnp.asarray(logpx, jnp.float32).reshape(B, 1)

    # --- sublane packing for small B: split each batch row into R sub-rows.
    R = 1
    for cand in (8, 4, 2):
        if D % cand == 0:
            R = cand
            break
    rows, cols = B * R, D // R
    xr = x2d.reshape(rows, cols)

    # --- lane-dense, sublane-aligned tiles (padded if shapes don't divide).
    rt = min(row_tile, _round_up(rows, 8))
    ct = min(col_tile, _round_up(cols, 128))
    rows_p = _round_up(rows, rt)
    cols_p = _round_up(cols, ct)
    pad_r, pad_c = rows_p - rows, cols_p - cols
    if pad_r or pad_c:
        # pad value 0.5 -> s = 0.5 exactly; its logdet contribution is a
        # compile-time constant that is subtracted back out below.
        xr = jnp.pad(xr, ((0, pad_r), (0, pad_c)), constant_values=0.5)

    grid = (rows_p // rt, cols_p // ct)   # rows parallel, reduction (D) last

    y_p, ldsum_p = pl.pallas_call(
        _make_kernel(float(alpha)),
        out_shape=(
            jax.ShapeDtypeStruct((rows_p, cols_p), jnp.float32),
            jax.ShapeDtypeStruct((rows_p, 1), jnp.float32),
        ),
        grid=grid,
        in_specs=[
            pl.BlockSpec((rt, ct), lambda i, k: (i, k)),
        ],
        out_specs=(
            pl.BlockSpec((rt, ct), lambda i, k: (i, k)),
            pl.BlockSpec((rt, 1), lambda i, k: (i, 0)),   # resident over k
        ),
        input_output_aliases={0: 0},       # y overwrites the padded x slab
        compiler_params=pltpu.CompilerParams(
            dimension_semantics=("parallel", "arbitrary")),
    )(xr)

    # --- undo padding / row split; finish the tiny per-batch fold in JAX.
    ld_rows = ldsum_p[:rows, 0]                                    # (rows,)
    if pad_c:
        ld_pad = -math.log(0.25) + math.log(1.0 - 2.0 * float(alpha))
        ld_rows = ld_rows - float(pad_c) * ld_pad
    ld_b = ld_rows.reshape(B, R).sum(axis=1, keepdims=True)        # (B, 1)

    y = y_p[:rows, :cols].reshape(B, D).reshape(orig_shape)
    return y, logpx - ld_b


def _reference(x, logpx, alpha=_DEFAULT_ALPHA):
    s = alpha + (1.0 - 2.0 * alpha) * x
    y = jnp.log(s) - jnp.log(1.0 - s)
    ld = -jnp.log(s - s * s) + math.log(1.0 - 2.0 * alpha)
    ld_sum = ld.reshape(x.shape[0], -1).sum(axis=1, keepdims=True)
    return y, logpx - ld_sum


if __name__ == "__main__":
    key = jax.random.PRNGKey(0)
    kx, kl = jax.random.split(key)

    B, C, H, W = 2, 4, 16, 16
    # x must lie in (0, 1) for the logit transform (Real NVP preprocessing).
    x = jax.random.uniform(kx, (B, C, H, W), dtype=jnp.float32,
                           minval=0.05, maxval=0.95)
    logpx = jax.random.normal(kl, (B, 1), dtype=jnp.float32)

    y, logp_out = logit_transform_forward(x, logpx)
    jax.block_until_ready((y, logp_out))

    y_ref, logp_ref = _reference(x, logpx)
    assert y.shape == (B, C, H, W) and logp_out.shape == (B, 1)
    assert jnp.allclose(y, y_ref, rtol=1e-5, atol=1e-5)
    assert jnp.allclose(logp_out, logp_ref, rtol=1e-4, atol=5e-3)

    print("KERNEL_OK")
</pallas_src>

<mosaic_0001>
module attributes {stable_mosaic.version = 11 : i64} {
  func.func @kernel(%arg0: i32, %arg1: i32, %arg2: memref<16x128xf32, #tpu.memory_space<vmem>>, %arg3: memref<16x128xf32, #tpu.memory_space<vmem>>, %arg4: memref<16x1xf32, #tpu.memory_space<vmem>>) attributes {dimension_semantics = [#tpu.dimension_semantics<parallel>, #tpu.dimension_semantics<arbitrary>], iteration_bounds = array<i64: 1, 1>, scalar_prefetch = 0 : i64, scratch_operands = 0 : i64, tpu.core_type = #tpu.core_type<tc>, window_params = [{transform_indices = @transform_0, window_bounds = array<i64: 16, 128>}, {transform_indices = @transform_1, window_bounds = array<i64: 16, 128>}, {transform_indices = @transform_2, window_bounds = array<i64: 16, 1>}]} {
    %c0_i32 = arith.constant 0 : i32
    %0 = arith.cmpi eq, %arg1, %c0_i32 : i32
    %1 = arith.extui %0 : i1 to i32
    %c0_i32_0 = arith.constant 0 : i32
    %2 = arith.cmpi ne, %1, %c0_i32_0 : i32
    scf.if %2 {
      %cst_12 = arith.constant 0.000000e+00 : f32
      %22 = vector.broadcast %cst_12 : f32 to vector<16x1xf32>
      %c0_13 = arith.constant 0 : index
      %c0_14 = arith.constant 0 : index
      %23 = vector.load %arg4[%c0_13, %c0_14] : memref<16x1xf32, #tpu.memory_space<vmem>>, vector<16x1xf32>
      tpu.vector_store %arg4[%c0_13, %c0_14], %22 {strides = array<i32>} : memref<16x1xf32, #tpu.memory_space<vmem>>, vector<16x1xf32>,
    } else {
    }
    %c0 = arith.constant 0 : index
    %c0_1 = arith.constant 0 : index
    %3 = vector.load %arg2[%c0, %c0_1] : memref<16x128xf32, #tpu.memory_space<vmem>>, vector<16x128xf32>
    %cst = arith.constant 0.999997973 : f32
    %4 = vector.broadcast %cst : f32 to vector<16x128xf32>
    %5 = arith.mulf %4, %3 : vector<16x128xf32>
    %cst_2 = arith.constant 9.99999997E-7 : f32
    %6 = vector.broadcast %cst_2 : f32 to vector<16x128xf32>
    %7 = arith.addf %6, %5 : vector<16x128xf32>
    %8 = math.log %7 : vector<16x128xf32>
    %cst_3 = arith.constant 1.000000e+00 : f32
    %9 = vector.broadcast %cst_3 : f32 to vector<16x128xf32>
    %10 = arith.subf %9, %7 : vector<16x128xf32>
    %11 = math.log %10 : vector<16x128xf32>
    %12 = arith.subf %8, %11 : vector<16x128xf32>
    %c0_4 = arith.constant 0 : index
    %c0_5 = arith.constant 0 : index
    %13 = vector.load %arg3[%c0_4, %c0_5] : memref<16x128xf32, #tpu.memory_space<vmem>>, vector<16x128xf32>
    tpu.vector_store %arg3[%c0_4, %c0_5], %12 {strides = array<i32>} : memref<16x128xf32, #tpu.memory_space<vmem>>, vector<16x128xf32>,
    %14 = arith.addf %8, %11 : vector<16x128xf32>
    %cst_6 = arith.constant -2.00000204E-6 : f32
    %15 = vector.broadcast %cst_6 : f32 to vector<16x128xf32>
    %16 = arith.subf %15, %14 : vector<16x128xf32>
    %c0_7 = arith.constant 0 : index
    %c0_8 = arith.constant 0 : index
    %17 = vector.load %arg4[%c0_7, %c0_8] : memref<16x1xf32, #tpu.memory_space<vmem>>, vector<16x1xf32>
    %cst_9 = arith.constant dense<0.000000e+00> : vector<16xf32>
    %18 = vector.multi_reduction <add>, %16, %cst_9 [1] : vector<16x128xf32> to vector<16xf32>
    %19 = vector.shape_cast %18 : vector<16xf32> to vector<16x1xf32>
    %20 = arith.addf %17, %19 : vector<16x1xf32>
    %c0_10 = arith.constant 0 : index
    %c0_11 = arith.constant 0 : index
    %21 = vector.load %arg4[%c0_10, %c0_11] : memref<16x1xf32, #tpu.memory_space<vmem>>, vector<16x1xf32>
    tpu.vector_store %arg4[%c0_10, %c0_11], %20 {strides = array<i32>} : memref<16x1xf32, #tpu.memory_space<vmem>>, vector<16x1xf32>,
    return
  }
  func.func @transform_0(%arg0: i32, %arg1: i32) -> (i32, i32) {
    %c0_i32 = arith.constant 0 : i32
    return %arg0, %arg1 : i32, i32
  }
  func.func @transform_1(%arg0: i32, %arg1: i32) -> (i32, i32) {
    %c0_i32 = arith.constant 0 : i32
    return %arg0, %arg1 : i32, i32
  }
  func.func @transform_2(%arg0: i32, %arg1: i32) -> (i32, i32) {
    %c0_i32 = arith.constant 0 : i32
    %c0_i32_0 = arith.constant 0 : i32
    return %arg0, %c0_i32 : i32, i32
  }
}

</mosaic_0001>

<llo_original>
// kernel: tpu_custom_call.1
$region0: #{tpu_custom_call.1}
  #allocation0 [shape = 'u32[]', space=smem, size = 0x4, offset = 0x4, fixed_abs, tag = 'smem constant byte address 0x4 - core index']
  #allocation1 [shape = 'u32[144,128]{1,0:T(1,128)}', space=vmem, size = 0x12000, scoped, tag = 'internal scratch']
  %s0 = inlined_call_operand.vmem [shape: f32[16,128], index: 0, kind: input, shape index: {}, may-alias: {0,1}]
  %s1 = inlined_call_operand.vmem [shape: f32[16,128], index: 1, kind: output, shape index: {0}, may-alias: {0,1}]
  %s2 = inlined_call_operand.vmem [shape: f32[16,1], index: 2, kind: output, shape index: {1}]
  %3 = xla_tuple %s1, %s2
  %s4 = sld [smem:[#allocation0]]
  $region26: #{tpu_custom_call.1} parent=0
    _
  %s6 = ssub.s32 1, %s4
  %s7 = scalar_select 0, %s6, %s4
  // Predicated region
  $region2: #{tpu_custom_call.1} parent=0 // pred_check
    _
  $region3: #{tpu_custom_call.1} parent=0 // pred_check_branch
    %9 = sbr.rel (0) target = $region5
  $region4: #{tpu_custom_call.1} parent=0 // pred_region
    _
  $region5: #{tpu_custom_call.1} parent=0 // pred_fallthru
    _
  %p10 = scmp.eq.s32.totalorder 0, 0
  // Predicated region
  $region6: #{tpu_custom_call.1} parent=0 // pred_check
    %p11 = pneg %p10
  $region7: #{tpu_custom_call.1} parent=0 // pred_check_branch
    %13 = sbr.rel (%p11) target = $region9
  $region8: #{tpu_custom_call.1} parent=0 // pred_region
    %vm14 = vcmask 7168
    %15 = vst.msk [vmem:[%s2] sm:$0xff] %vm14, 0.0
    %16 = vst.msk [vmem:[%s2 + $0x8] sm:$0xff] %vm14, 0.0
  $region9: #{tpu_custom_call.1} parent=0 // pred_fallthru
    _
  %v17 = vld [vmem:[%s0] sm:$0xff]
  %v18 = vld [vmem:[%s0 + $0x8] sm:$0xff]
  %v19 = vmul.f32 %v17, 0.999998
  %v20 = vmul.f32 %v18, 0.999998
  %v21 = vadd.f32 %v19, 1e-06
  %v22 = vadd.f32 %v20, 1e-06
  %v23 = vlog2.pop %v21
  %v24 = vmul.f32 %v23, 0.6931472
  %v25 = vlog2.pop %v22
  %v26 = vmul.f32 %v25, 0.6931472
  %v27 = vsub.f32 1.0, %v21
  %v28 = vsub.f32 1.0, %v22
  %v29 = vlog2.pop %v27
  %v30 = vmul.f32 %v29, 0.6931472
  %v31 = vlog2.pop %v28
  %v32 = vmul.f32 %v31, 0.6931472
  %v33 = vsub.f32 %v24, %v30
  %v34 = vsub.f32 %v26, %v32
  %35 = vst [vmem:[%s1] sm:$0xff] %v33
  %36 = vst [vmem:[%s1 + $0x8] sm:$0xff] %v34
  %v37 = vadd.f32 %v24, %v30
  %v38 = vadd.f32 %v26, %v32
  %v39 = vsub.f32 -2.000002e-06, %v37
  %v40 = vsub.f32 -2.000002e-06, %v38
  %v41 = vld [vmem:[%s2] sm:$0xff]
  %v42 = vld [vmem:[%s2 + $0x8] sm:$0xff]
  %43 = vadd.xlane.f32.xlu0 %v39
  %v44 = vpop.xlane.xlu0 %43
  %45 = vadd.xlane.f32.xlu0 %v40
  %v46 = vpop.xlane.xlu0 %45
  %v47 = vadd.f32 %v41, %v44
  %v48 = vadd.f32 %v42, %v46
  %vm49 = vcmask 7168
  %50 = vst.msk [vmem:[%s2] sm:$0xff] %vm49, %v47
  %51 = vst.msk [vmem:[%s2 + $0x8] sm:$0xff] %vm49, %v48
  // Predicated region
  $region10: #{tpu_custom_call.1} parent=0 // pred_check
    _
  $region11: #{tpu_custom_call.1} parent=0 // pred_check_branch
    %53 = sbr.rel (0) target = $region13
  $region12: #{tpu_custom_call.1} parent=0 // pred_region
    _
  $region13: #{tpu_custom_call.1} parent=0 // pred_fallthru
    _
  // Predicated region
  $region14: #{tpu_custom_call.1} parent=0 // pred_check
    _
  $region15: #{tpu_custom_call.1} parent=0 // pred_check_branch
    %55 = sbr.rel (0) target = $region17
  $region16: #{tpu_custom_call.1} parent=0 // pred_region
    _
  $region17: #{tpu_custom_call.1} parent=0 // pred_fallthru
    _
  // Predicated region
  $region18: #{tpu_custom_call.1} parent=0 // pred_check
    _
  $region19: #{tpu_custom_call.1} parent=0 // pred_check_branch
    %57 = sbr.rel (0) target = $region21
  $region20: #{tpu_custom_call.1} parent=0 // pred_region
    _
  $region21: #{tpu_custom_call.1} parent=0 // pred_fallthru
    _
  // Predicated region
  $region22: #{tpu_custom_call.1} parent=0 // pred_check
    _
  $region23: #{tpu_custom_call.1} parent=0 // pred_check_branch
    %59 = sbr.rel (0) target = $region25
  $region24: #{tpu_custom_call.1} parent=0 // pred_region
    _
  $region25: #{tpu_custom_call.1} parent=0 // pred_fallthru
    _

</llo_original>
